<compile_context>
chip_gen: v7x
topology: tpu7x:2x2x1
jax: 0.10.0
libtpu: 0.0.40
codegen_flags: <defaults>
</compile_context>

<pallas_src>
import math
import functools

import jax
import jax.numpy as jnp
from jax.experimental import pallas as pl
from jax.experimental.pallas import tpu as pltpu


_GELU_C = math.sqrt(2.0 / math.pi)


def _gelu_tanh(x):
    # PyTorch nn.GELU(approximate='tanh'):
    # 0.5 * x * (1 + tanh(sqrt(2/pi) * (x + 0.044715 * x^3)))
    return 0.5 * x * (1.0 + jnp.tanh(_GELU_C * (x + 0.044715 * x * x * x)))


# ----------------------------------------------------------------------------
# Kernels
# ----------------------------------------------------------------------------
def _mlp_kernel_resident(x_ref, wfc_ref, bfc_ref, wproj_ref, bproj_ref, o_ref,
                         *, gelu_dtype):
    # Grid: (i over row tiles). Weights/biases have constant block indices, so
    # Pallas fetches them once per pallas_call (no re-streaming per row tile).
    h = jnp.dot(x_ref[...], wfc_ref[...], preferred_element_type=jnp.float32)
    h = (h + bfc_ref[...]).astype(gelu_dtype)          # bf16 on v6e/v7x, f32 on v5e
    g = _gelu_tanh(h).astype(wproj_ref.dtype)
    out = jnp.dot(g, wproj_ref[...], preferred_element_type=jnp.float32)
    o_ref[...] = (out + bproj_ref[...]).astype(o_ref.dtype)


def _mlp_kernel_chunked(x_ref, wfc_ref, bfc_ref, wproj_ref, bproj_ref, o_ref,
                        acc_ref, *, gelu_dtype):
    # Grid: (i over row tiles [parallel], k over H chunks [arbitrary]).
    k = pl.program_id(1)

    h = jnp.dot(x_ref[...], wfc_ref[...], preferred_element_type=jnp.float32)
    h = (h + bfc_ref[...]).astype(gelu_dtype)
    g = _gelu_tanh(h).astype(wproj_ref.dtype)
    p = jnp.dot(g, wproj_ref[...], preferred_element_type=jnp.float32)

    @pl.when(k == 0)
    def _():
        # Fold bias + init into the first step: no zero-fill, no finalize add.
        acc_ref[...] = p + bproj_ref[...]

    @pl.when(k > 0)
    def _():
        acc_ref[...] += p

    @pl.when(k == pl.num_programs(1) - 1)
    def _():
        o_ref[...] = acc_ref[...].astype(o_ref.dtype)


# ----------------------------------------------------------------------------
# Helpers
# ----------------------------------------------------------------------------
def _round_up(x, m):
    return ((x + m - 1) // m) * m


def _pick_tm(M, desired):
    """Row tile: pad M up rather than shrink/misalign the tile."""
    if M <= desired:
        return _round_up(M, 8)
    for t in (desired, desired // 2, 256, 128):
        if t >= 128 and (_round_up(M, t) - M) <= max(M // 8, t // 2):
            return t
    return 128


def _pick_th(H, desired):
    """Largest 128-multiple <= desired dividing H (chunked path only)."""
    if H <= desired:
        return H
    t = max((desired // 128) * 128, 128)
    while t > 128 and H % t != 0:
        t -= 128
    return t if H % t == 0 else H


def _vmem_budget_bytes():
    try:
        cap = pltpu.get_tpu_info().vmem_capacity_bytes
    except Exception:
        cap = 64 << 20          # be conservative (v7x: 64 MiB / TC)
    return int(cap * 3 // 4)    # leave headroom for compiler-internal scratch


def _default_gelu_dtype(compute_dtype):
    # bf16 elementwise only where the VPU/EUP have bf16 paths (v6e / v7x).
    if jnp.dtype(compute_dtype) == jnp.dtype(jnp.float32):
        return jnp.float32
    try:
        kind = jax.devices()[0].device_kind.lower()
    except Exception:
        return jnp.float32
    if ("v6" in kind) or ("v7" in kind):
        return jnp.bfloat16
    return jnp.float32          # v5e and older: no bf16 VPU/EUP


def prepare_mlp_params(w_fc, b_fc, w_proj, b_proj, compute_dtype=jnp.bfloat16):
    """Cast/pack weights ONCE (outside the per-call path).

    w_fc: [C, 4C], w_proj: [4C, C] (already transposed to [in, out]).
    Biases stay f32 (added in f32 inside the kernel).
    """
    cd = jnp.dtype(compute_dtype)
    return (w_fc.astype(cd),
            b_fc.reshape(1, -1).astype(jnp.float32),
            w_proj.astype(cd),
            b_proj.reshape(1, -1).astype(jnp.float32))


# ----------------------------------------------------------------------------
# Entry point
# ----------------------------------------------------------------------------
@functools.partial(jax.jit, static_argnames=("tm", "th", "max_vmem_bytes"))
def mlp_pallas(x, w_fc, b_fc, w_proj, b_proj, *, tm=512, th=1024,
               max_vmem_bytes=None):
    """x: [B, T, C]. Weights as returned by prepare_mlp_params."""
    B, T, C = x.shape
    H = w_fc.shape[1]
    M = B * T

    cd = jnp.dtype(w_fc.dtype)               # compute dtype (MXU input dtype)
    out_dtype = x.dtype                       # emit final dtype from the kernel
    gelu_dtype = _default_gelu_dtype(cd)
    if max_vmem_bytes is None:
        max_vmem_bytes = _vmem_budget_bytes()

    tm_eff = _pick_tm(M, tm)
    Mp = _round_up(M, tm_eff)

    x2 = x.reshape(M, C).astype(cd)
    if Mp > M:
        x2 = jnp.pad(x2, ((0, Mp - M), (0, 0)))

    in_isz = cd.itemsize
    out_isz = jnp.dtype(out_dtype).itemsize
    num_i = Mp // tm_eff

    # --- Resident-weights estimate (conservative: double-buffered weights). ---
    est_res = (2 * tm_eff * C * in_isz            # x tile
               + 2 * tm_eff * C * out_isz         # out tile
               + 2 * 2 * C * H * in_isz           # w_fc + w_proj
               + 2 * (H + C) * 4                  # biases
               + tm_eff * H * 4)                  # (tm, H) hidden intermediate
    use_resident = (est_res <= int(0.9 * max_vmem_bytes)) or (H % 128 != 0)

    if use_resident:
        vmem_limit = int(min(max(int(est_res * 1.25), 4 << 20), max_vmem_bytes))
        cost = pl.CostEstimate(
            flops=4 * Mp * C * H,
            transcendentals=Mp * H,
            bytes_accessed=(Mp * C * in_isz + 2 * C * H * in_isz
                            + (H + C) * 4 + Mp * C * out_isz),
        )
        out2 = pl.pallas_call(
            functools.partial(_mlp_kernel_resident, gelu_dtype=gelu_dtype),
            out_shape=jax.ShapeDtypeStruct((Mp, C), out_dtype),
            grid_spec=pltpu.PrefetchScalarGridSpec(
                num_scalar_prefetch=0,
                grid=(num_i,),
                in_specs=[
                    pl.BlockSpec((tm_eff, C), lambda i: (i, 0)),  # x row tile
                    pl.BlockSpec((C, H), lambda i: (0, 0)),       # w_fc (resident)
                    pl.BlockSpec((1, H), lambda i: (0, 0)),       # b_fc (resident)
                    pl.BlockSpec((H, C), lambda i: (0, 0)),       # w_proj (resident)
                    pl.BlockSpec((1, C), lambda i: (0, 0)),       # b_proj (resident)
                ],
                out_specs=pl.BlockSpec((tm_eff, C), lambda i: (i, 0)),
            ),
            compiler_params=pltpu.CompilerParams(
                dimension_semantics=("parallel",),
                vmem_limit_bytes=vmem_limit,
            ),
            cost_estimate=cost,
        )(x2, w_fc, b_fc, w_proj, b_proj)
    else:
        th_eff = _pick_th(H, th)
        num_k = H // th_eff
        est_chk = (2 * tm_eff * C * in_isz
                   + 2 * tm_eff * C * out_isz
                   + 2 * 2 * C * th_eff * in_isz
                   + 2 * (th_eff + C) * 4
                   + tm_eff * C * 4                  # f32 accumulator scratch
                   + tm_eff * th_eff * 4)            # hidden chunk intermediate
        vmem_limit = int(min(max(int(est_chk * 1.25), 4 << 20), max_vmem_bytes))
        cost = pl.CostEstimate(
            flops=4 * Mp * C * H,
            transcendentals=Mp * H,
            bytes_accessed=(Mp * C * in_isz
                            + num_i * 2 * C * H * in_isz   # weights re-streamed per row tile
                            + num_i * H * 4 + C * 4
                            + Mp * C * out_isz),
        )
        out2 = pl.pallas_call(
            functools.partial(_mlp_kernel_chunked, gelu_dtype=gelu_dtype),
            out_shape=jax.ShapeDtypeStruct((Mp, C), out_dtype),
            grid_spec=pltpu.PrefetchScalarGridSpec(
                num_scalar_prefetch=0,
                grid=(num_i, num_k),
                in_specs=[
                    pl.BlockSpec((tm_eff, C), lambda i, k: (i, 0)),   # x (resident over k)
                    pl.BlockSpec((C, th_eff), lambda i, k: (0, k)),   # w_fc H-chunk
                    pl.BlockSpec((1, th_eff), lambda i, k: (0, k)),   # b_fc H-chunk
                    pl.BlockSpec((th_eff, C), lambda i, k: (k, 0)),   # w_proj H-chunk
                    pl.BlockSpec((1, C), lambda i, k: (0, 0)),        # b_proj
                ],
                out_specs=pl.BlockSpec((tm_eff, C), lambda i, k: (i, 0)),
                scratch_shapes=[pltpu.VMEM((tm_eff, C), jnp.float32)],
            ),
            compiler_params=pltpu.CompilerParams(
                dimension_semantics=("parallel", "arbitrary"),
                vmem_limit_bytes=vmem_limit,
            ),
            cost_estimate=cost,
        )(x2, w_fc, b_fc, w_proj, b_proj)

    return out2[:M].reshape(B, T, C)


def mlp_reference(x, w_fc, b_fc, w_proj, b_proj):
    h = x @ w_fc + b_fc
    g = _gelu_tanh(h)
    return g @ w_proj + b_proj


if __name__ == "__main__":
    # Small GPT-2-style config: n_embed=32, hidden=4*n_embed=128, B=2, T=8.
    # NOTE: tune/benchmark only at real shapes (C multiple of 128) — C=32 gives
    # masked partial stores and is for correctness checking only.
    B, T, C = 2, 8, 32
    H = 4 * C

    key = jax.random.PRNGKey(0)
    kx, kwf, kbf, kwp, kbp = jax.random.split(key, 5)

    x = jax.random.normal(kx, (B, T, C), dtype=jnp.float32)

    # nn.Linear-style init: U(-1/sqrt(fan_in), 1/sqrt(fan_in)), pre-transposed [in, out].
    lim_fc = 1.0 / math.sqrt(C)
    w_fc = jax.random.uniform(kwf, (C, H), jnp.float32, -lim_fc, lim_fc)
    b_fc = jax.random.uniform(kbf, (H,), jnp.float32, -lim_fc, lim_fc)

    lim_pr = 1.0 / math.sqrt(H)
    w_proj = jax.random.uniform(kwp, (H, C), jnp.float32, -lim_pr, lim_pr)
    b_proj = jax.random.uniform(kbp, (C,), jnp.float32, -lim_pr, lim_pr)

    ref = mlp_reference(x, w_fc, b_fc, w_proj, b_proj)

    # f32 compute path: tight check against the reference.
    params_f32 = prepare_mlp_params(w_fc, b_fc, w_proj, b_proj,
                                    compute_dtype=jnp.float32)
    out_f32 = jax.block_until_ready(mlp_pallas(x, *params_f32))
    assert out_f32.shape == (B, T, C)
    assert jnp.allclose(out_f32, ref, atol=1e-5, rtol=1e-5), "f32 mismatch vs reference"

    # Default bf16 fast path (MXU-native inputs, f32 accumulation). Note: results
    # intentionally deviate slightly from the f32 reference (bf16 inputs).
    params_bf16 = prepare_mlp_params(w_fc, b_fc, w_proj, b_proj,
                                     compute_dtype=jnp.bfloat16)
    out_bf16 = jax.block_until_ready(mlp_pallas(x, *params_bf16))
    assert out_bf16.shape == (B, T, C)
    assert jnp.allclose(out_bf16, ref, atol=3e-2, rtol=3e-2), "bf16 mismatch vs reference"

    print("KERNEL_OK")
</pallas_src>

<mosaic_0001>
module attributes {stable_mosaic.version = 11 : i64} {
  func.func @_mlp_kernel_resident(%arg0: i32, %arg1: memref<16x32xf32, #tpu.memory_space<vmem>>, %arg2: memref<32x128xf32, #tpu.memory_space<vmem>>, %arg3: memref<1x128xf32, #tpu.memory_space<vmem>>, %arg4: memref<128x32xf32, #tpu.memory_space<vmem>>, %arg5: memref<1x32xf32, #tpu.memory_space<vmem>>, %arg6: memref<16x32xf32, #tpu.memory_space<vmem>>) attributes {dimension_semantics = [#tpu.dimension_semantics<parallel>], iteration_bounds = array<i64: 1>, scalar_prefetch = 0 : i64, scratch_operands = 0 : i64, tpu.core_type = #tpu.core_type<tc>, window_params = [{transform_indices = @transform_0, window_bounds = array<i64: 16, 32>}, {pipeline_mode = #tpu.pipeline_mode<synchronous>, transform_indices = @transform_1, window_bounds = array<i64: 32, 128>}, {pipeline_mode = #tpu.pipeline_mode<synchronous>, transform_indices = @transform_2, window_bounds = array<i64: 1, 128>}, {pipeline_mode = #tpu.pipeline_mode<synchronous>, transform_indices = @transform_3, window_bounds = array<i64: 128, 32>}, {pipeline_mode = #tpu.pipeline_mode<synchronous>, transform_indices = @transform_4, window_bounds = array<i64: 1, 32>}, {transform_indices = @transform_5, window_bounds = array<i64: 16, 32>}]} {
    %c0 = arith.constant 0 : index
    %c0_0 = arith.constant 0 : index
    %0 = vector.load %arg1[%c0, %c0_0] : memref<16x32xf32, #tpu.memory_space<vmem>>, vector<16x32xf32>
    %c0_1 = arith.constant 0 : index
    %c0_2 = arith.constant 0 : index
    %1 = vector.load %arg2[%c0_1, %c0_2] : memref<32x128xf32, #tpu.memory_space<vmem>>, vector<32x128xf32>
    %cst = arith.constant dense<0.000000e+00> : vector<16x128xf32>
    %2 = tpu.matmul %0, %1, %cst {dimension_numbers = #tpu.dot_dimension_numbers<[1], [0], [0], [1], [0, 0, 1, 1], [], []>} : vector<16x32xf32>, vector<32x128xf32>, vector<16x128xf32> -> vector<16x128xf32>
    %c0_3 = arith.constant 0 : index
    %c0_4 = arith.constant 0 : index
    %3 = vector.load %arg3[%c0_3, %c0_4] : memref<1x128xf32, #tpu.memory_space<vmem>>, vector<1x128xf32>
    %4 = vector.broadcast %3 : vector<1x128xf32> to vector<16x128xf32>
    %5 = arith.addf %2, %4 : vector<16x128xf32>
    %cst_5 = arith.constant 5.000000e-01 : f32
    %6 = vector.broadcast %cst_5 : f32 to vector<16x128xf32>
    %7 = arith.mulf %6, %5 : vector<16x128xf32>
    %cst_6 = arith.constant 4.471500e-02 : f32
    %8 = vector.broadcast %cst_6 : f32 to vector<16x128xf32>
    %9 = arith.mulf %8, %5 : vector<16x128xf32>
    %10 = arith.mulf %9, %5 : vector<16x128xf32>
    %11 = arith.mulf %10, %5 : vector<16x128xf32>
    %12 = arith.addf %5, %11 : vector<16x128xf32>
    %cst_7 = arith.constant 0.797884583 : f32
    %13 = vector.broadcast %cst_7 : f32 to vector<16x128xf32>
    %14 = arith.mulf %13, %12 : vector<16x128xf32>
    %15 = math.tanh %14 : vector<16x128xf32>
    %cst_8 = arith.constant 1.000000e+00 : f32
    %16 = vector.broadcast %cst_8 : f32 to vector<16x128xf32>
    %17 = arith.addf %16, %15 : vector<16x128xf32>
    %18 = arith.mulf %7, %17 : vector<16x128xf32>
    %c0_9 = arith.constant 0 : index
    %c0_10 = arith.constant 0 : index
    %19 = vector.load %arg4[%c0_9, %c0_10] : memref<128x32xf32, #tpu.memory_space<vmem>>, vector<128x32xf32>
    %cst_11 = arith.constant dense<0.000000e+00> : vector<16x32xf32>
    %20 = tpu.matmul %18, %19, %cst_11 {dimension_numbers = #tpu.dot_dimension_numbers<[1], [0], [0], [1], [0, 0, 1, 1], [], []>} : vector<16x128xf32>, vector<128x32xf32>, vector<16x32xf32> -> vector<16x32xf32>
    %c0_12 = arith.constant 0 : index
    %c0_13 = arith.constant 0 : index
    %21 = vector.load %arg5[%c0_12, %c0_13] : memref<1x32xf32, #tpu.memory_space<vmem>>, vector<1x32xf32>
    %22 = vector.broadcast %21 : vector<1x32xf32> to vector<16x32xf32>
    %23 = arith.addf %20, %22 : vector<16x32xf32>
    %c0_14 = arith.constant 0 : index
    %c0_15 = arith.constant 0 : index
    %24 = vector.load %arg6[%c0_14, %c0_15] : memref<16x32xf32, #tpu.memory_space<vmem>>, vector<16x32xf32>
    tpu.vector_store %arg6[%c0_14, %c0_15], %23 {strides = array<i32>} : memref<16x32xf32, #tpu.memory_space<vmem>>, vector<16x32xf32>,
    return
  }
  func.func @transform_0(%arg0: i32) -> (i32, i32) {
    %c0_i32 = arith.constant 0 : i32
    %c0_i32_0 = arith.constant 0 : i32
    return %arg0, %c0_i32 : i32, i32
  }
  func.func @transform_1(%arg0: i32) -> (i32, i32) {
    %c0_i32 = arith.constant 0 : i32
    %c0_i32_0 = arith.constant 0 : i32
    %c0_i32_1 = arith.constant 0 : i32
    return %c0_i32, %c0_i32_0 : i32, i32
  }
  func.func @transform_2(%arg0: i32) -> (i32, i32) {
    %c0_i32 = arith.constant 0 : i32
    %c0_i32_0 = arith.constant 0 : i32
    %c0_i32_1 = arith.constant 0 : i32
    return %c0_i32, %c0_i32_0 : i32, i32
  }
  func.func @transform_3(%arg0: i32) -> (i32, i32) {
    %c0_i32 = arith.constant 0 : i32
    %c0_i32_0 = arith.constant 0 : i32
    %c0_i32_1 = arith.constant 0 : i32
    return %c0_i32, %c0_i32_0 : i32, i32
  }
  func.func @transform_4(%arg0: i32) -> (i32, i32) {
    %c0_i32 = arith.constant 0 : i32
    %c0_i32_0 = arith.constant 0 : i32
    %c0_i32_1 = arith.constant 0 : i32
    return %c0_i32, %c0_i32_0 : i32, i32
  }
  func.func @transform_5(%arg0: i32) -> (i32, i32) {
    %c0_i32 = arith.constant 0 : i32
    %c0_i32_0 = arith.constant 0 : i32
    return %arg0, %c0_i32 : i32, i32
  }
}

</mosaic_0001>

<llo_original>
// kernel: mlp_pallas.1
$region0: #{mlp_pallas.1}
  #allocation0 [shape = 'u32[]', space=smem, size = 0x4, offset = 0x4, fixed_abs, tag = 'smem constant byte address 0x4 - core index']
  #allocation1 [shape = 'u32[144,128]{1,0:T(1,128)}', space=vmem, size = 0x12000, scoped, tag = 'internal scratch']
  %s0 = inlined_call_operand.vmem [shape: f32[16,32], index: 0, kind: input, shape index: {}]
  %s1 = inlined_call_operand.vmem [shape: f32[32,128], index: 1, kind: input, shape index: {}]
  %s2 = inlined_call_operand.vmem [shape: f32[1,128], index: 2, kind: input, shape index: {}]
  %s3 = inlined_call_operand.vmem [shape: f32[128,32], index: 3, kind: input, shape index: {}]
  %s4 = inlined_call_operand.vmem [shape: f32[1,32], index: 4, kind: input, shape index: {}]
  %s5 = inlined_call_operand.hbm [shape: f32[16,32], index: 5, kind: output, shape index: {}]
  %s6 = sld [smem:[#allocation0]]
  $region30: #{mlp_pallas.1} parent=0
    _
  %s8 = ssub.s32 1, %s6
  %s9 = scalar_select 0, %s8, %s6
  $region1: #{mlp_pallas.1} parent=0
    #allocation2 [shape = 'u8[8192]{0}', space=vmem, size = 0x2000, scoped, tag = 'output window, operand 0, single buffered']
    #allocation3 [shape = 's32[1]{0}', space=sflag, size = 0x4, scoped, tag = 'scoped memory for mlp_pallas.1']
    %10 = vsyncpa [#allocation3], 0
    // Predicated region
    $region2: #{mlp_pallas.1} parent=1 // pred_check
      _
    $region3: #{mlp_pallas.1} parent=1 // pred_check_branch
      %12 = sbr.rel (0) target = $region5
    $region4: #{mlp_pallas.1} parent=1 // pred_region
      _
    $region5: #{mlp_pallas.1} parent=1 // pred_fallthru
      _
    // Predicated region
    $region6: #{mlp_pallas.1} parent=1 // pred_check
      _
    $region7: #{mlp_pallas.1} parent=1 // pred_check_branch
      %14 = sbr.rel (0) target = $region9
    $region8: #{mlp_pallas.1} parent=1 // pred_region
      _
    $region9: #{mlp_pallas.1} parent=1 // pred_fallthru
      _
    // Predicated region
    $region10: #{mlp_pallas.1} parent=1 // pred_check
      _
    $region11: #{mlp_pallas.1} parent=1 // pred_check_branch
      %16 = sbr.rel (0) target = $region13
    $region12: #{mlp_pallas.1} parent=1 // pred_region
      _
    $region13: #{mlp_pallas.1} parent=1 // pred_fallthru
      _
    // Predicated region
    $region14: #{mlp_pallas.1} parent=1 // pred_check
      _
    $region15: #{mlp_pallas.1} parent=1 // pred_check_branch
      %18 = sbr.rel (0) target = $region17
    $region16: #{mlp_pallas.1} parent=1 // pred_region
      _
    $region17: #{mlp_pallas.1} parent=1 // pred_fallthru
      _
    // Predicated region
    $region18: #{mlp_pallas.1} parent=1 // pred_check
      _
    $region19: #{mlp_pallas.1} parent=1 // pred_check_branch
      %20 = sbr.rel (0) target = $region21
    $region20: #{mlp_pallas.1} parent=1 // pred_region
      _
    $region21: #{mlp_pallas.1} parent=1 // pred_fallthru
      _
    %v21 = vld [vmem:[%s0] sm:$0xff]
    %v22 = vld [vmem:[%s0 + $0x8] sm:$0xff]
    %v23 = vld [vmem:[%s1] sm:$0xff]
    %v24 = vld [vmem:[%s1 + $0x8] sm:$0xff]
    %v25 = vld [vmem:[%s1 + $0x10] sm:$0xff]
    %v26 = vld [vmem:[%s1 + $0x18] sm:$0xff]
    %v27 = vld [vmem:[%s2] sm:$0x1]
    %v29 = vlaneseq
    %v30 = vshrl.u32 %v29, 7
    %v31 = vsub.s32 0, %v30
    %v32 = vrot.slane %v27, %v31
    %vm34 = vcmask 261120
    %v36 = vsel %vm34, %v21, 0
    %v39 = vsel %vm34, %v22, 0
    %41 = vmatprep.subr.mxu0 0.0
    %42 = vmatpush1.msra.mxu0 %v23
    %43 = vmatprep.subr.mxu0 0.0
    %44 = vmatpush1.msra.mxu0 %v24
    %45 = vmatprep.subr.mxu0 0.0
    %46 = vmatpush1.msra.mxu0 %v25
    %47 = vmatprep.subr.mxu0 0.0
    %48 = vmatpush1.msra.mxu0 %v26
    %49 = vmatprep.subr.mxu0 0.0
    %50 = vmatpush1.msra.mxu0 0.0
    %51 = vmatprep.subr.mxu0 0.0
    %52 = vmatpush1.msra.mxu0 0.0
    %53 = vmatprep.subr.mxu0 0.0
    %54 = vmatpush1.msra.mxu0 0.0
    %55 = vmatprep.subr.mxu0 0.0
    %56 = vmatpush1.msra.mxu0 0.0
    %57 = vmatprep.subr.mxu0 0.0
    %58 = vmatpush1.msra.mxu0 0.0
    %59 = vmatprep.subr.mxu0 0.0
    %60 = vmatpush1.msra.mxu0 0.0
    %61 = vmatprep.subr.mxu0 0.0
    %62 = vmatpush1.msra.mxu0 0.0
    %63 = vmatprep.subr.mxu0 0.0
    %64 = vmatpush1.msra.mxu0 0.0
    %65 = vmatprep.subr.mxu0 0.0
    %66 = vmatpush1.msra.mxu0 0.0
    %67 = vmatprep.subr.mxu0 0.0
    %68 = vmatpush1.msra.mxu0 0.0
    %69 = vmatprep.subr.mxu0 0.0
    %70 = vmatpush1.msra.mxu0 0.0
    %71 = vmatprep.subr.mxu0 0.0
    %72 = vmatpush1.msra.mxu0 0.0
    %73 = vmatprep.subr.mxu0 0.0
    %74 = vmatpush1.msra.mxu0 0.0
    %75 = vmatprep.subr.mxu0 0.0
    %76 = vmatpush1.msra.mxu0 0.0
    %77 = vmatprep.subr.mxu0 0.0
    %78 = vmatpush1.msra.mxu0 0.0
    %79 = vmatprep.subr.mxu0 0.0
    %80 = vmatpush1.msra.mxu0 0.0
    %81 = vmatprep.subr.mxu0 0.0
    %82 = vmatpush1.msra.mxu0 0.0
    %83 = vmatprep.subr.mxu0 0.0
    %84 = vmatpush1.msra.mxu0 0.0
    %85 = vmatprep.subr.mxu0 0.0
    %86 = vmatpush1.msra.mxu0 0.0
    %87 = vmatprep.subr.mxu0 0.0
    %88 = vmatpush1.msra.mxu0 0.0
    %89 = vmatprep.subr.mxu0 0.0
    %90 = vmatpush1.msra.mxu0 0.0
    %91 = vmatprep.subr.mxu0 0.0
    %92 = vmatpush1.msra.mxu0 0.0
    %93 = vmatprep.subr.mxu0 0.0
    %94 = vmatpush1.msra.mxu0 0.0
    %95 = vmatprep.subr.mxu0 0.0
    %96 = vmatpush1.msra.mxu0 0.0
    %97 = vmatprep.subr.mxu0 0.0
    %98 = vmatpush1.msra.mxu0 0.0
    %99 = vmatprep.subr.mxu0 0.0
    %100 = vmatpush1.msra.mxu0 0.0
    %101 = vmatprep.subr.mxu0 0.0
    %102 = vmatpush1.msra.mxu0 0.0
    %103 = vmatprep.subr.mxu0 0.0
    %104 = vmatpush1.msra.mxu0 0.0
    %105 = vmatprep.mubr.f32.mxu0 0.0
    %106 = vmatmul.mubr.f32.gmra.mrb[0].mxu0 %v36
    %v107 = vpop.f32.mrb[0].mxu0
    %v108 = vadd.f32 %v32, %v107
    %v109 = vpop.f32.mrb[0].mxu0
    %110 = vmatprep.mubr.f32.mxu0 0.0
    %111 = vmatmul.mubr.f32.gmra.mrb[0].mxu0 %v39
    %v112 = vpop.f32.mrb[0].mxu0
    %v113 = vadd.f32 %v32, %v112
    %v114 = vpop.f32.mrb[0].mxu0
    %115 = vdwg.mxu0
    %v116 = vmul.f32 %v108, 0.5
    %v117 = vmul.f32 %v113, 0.5
    %v118 = vmul.f32 %v108, 0.044715
    %v119 = vmul.f32 %v113, 0.044715
    %v120 = vmul.f32 %v118, %v108
    %v121 = vmul.f32 %v119, %v113
    %v122 = vmul.f32 %v120, %v108
    %v123 = vmul.f32 %v121, %v113
    %v124 = vadd.f32 %v108, %v122
    %v125 = vadd.f32 %v113, %v123
    %v126 = vmul.f32 %v124, 0.7978846
    %v127 = vmul.f32 %v125, 0.7978846
    %v128 = vtanh.pop %v126
    %v129 = vtanh.pop %v127
    %v130 = vadd.f32 %v128, 1.0
    %v131 = vadd.f32 %v129, 1.0
    %v132 = vmul.f32 %v116, %v130
    %v133 = vmul.f32 %v117, %v131
    %v134 = vld [vmem:[%s3] sm:$0xff]
    %v135 = vld [vmem:[%s3 + $0x8] sm:$0xff]
    %v136 = vld [vmem:[%s3 + $0x10] sm:$0xff]
    %v137 = vld [vmem:[%s3 + $0x18] sm:$0xff]
    %v138 = vld [vmem:[%s3 + $0x20] sm:$0xff]
    %v139 = vld [vmem:[%s3 + $0x28] sm:$0xff]
    %v140 = vld [vmem:[%s3 + $0x30] sm:$0xff]
    %v141 = vld [vmem:[%s3 + $0x38] sm:$0xff]
    %v142 = vld [vmem:[%s3 + $0x40] sm:$0xff]
    %v143 = vld [vmem:[%s3 + $0x48] sm:$0xff]
    %v144 = vld [vmem:[%s3 + $0x50] sm:$0xff]
    %v145 = vld [vmem:[%s3 + $0x58] sm:$0xff]
    %v146 = vld [vmem:[%s3 + $0x60] sm:$0xff]
    %v147 = vld [vmem:[%s3 + $0x68] sm:$0xff]
    %v148 = vld [vmem:[%s3 + $0x70] sm:$0xff]
    %v149 = vld [vmem:[%s3 + $0x78] sm:$0xff]
    %v150 = vld [vmem:[%s4] sm:$0x1]
    %v152 = vlaneseq
    %v153 = vshrl.u32 %v152, 7
    %v154 = vsub.s32 0, %v153
    %v155 = vrot.slane %v150, %v154
    %157 = vmatprep.subr.mxu0 0.0
    %158 = vmatpush1.msra.mxu0 %v134
    %159 = vmatprep.subr.mxu0 0.0
    %160 = vmatpush1.msra.mxu0 %v135
    %161 = vmatprep.subr.mxu0 0.0
    %162 = vmatpush1.msra.mxu0 %v136
    %163 = vmatprep.subr.mxu0 0.0
    %164 = vmatpush1.msra.mxu0 %v137
    %165 = vmatprep.subr.mxu0 0.0
    %166 = vmatpush1.msra.mxu0 %v138
    %167 = vmatprep.subr.mxu0 0.0
    %168 = vmatpush1.msra.mxu0 %v139
    %169 = vmatprep.subr.mxu0 0.0
    %170 = vmatpush1.msra.mxu0 %v140
    %171 = vmatprep.subr.mxu0 0.0
    %172 = vmatpush1.msra.mxu0 %v141
    %173 = vmatprep.subr.mxu0 0.0
    %174 = vmatpush1.msra.mxu0 %v142
    %175 = vmatprep.subr.mxu0 0.0
    %176 = vmatpush1.msra.mxu0 %v143
    %177 = vmatprep.subr.mxu0 0.0
    %178 = vmatpush1.msra.mxu0 %v144
    %179 = vmatprep.subr.mxu0 0.0
    %180 = vmatpush1.msra.mxu0 %v145
    %181 = vmatprep.subr.mxu0 0.0
    %182 = vmatpush1.msra.mxu0 %v146
    %183 = vmatprep.subr.mxu0 0.0
    %184 = vmatpush1.msra.mxu0 %v147
    %185 = vmatprep.subr.mxu0 0.0
    %186 = vmatpush1.msra.mxu0 %v148
    %187 = vmatprep.subr.mxu0 0.0
    %188 = vmatpush1.msra.mxu0 %v149
    %189 = vmatprep.subr.mxu0 0.0
    %190 = vmatpush1.msra.mxu0 0.0
    %191 = vmatprep.subr.mxu0 0.0
    %192 = vmatpush1.msra.mxu0 0.0
    %193 = vmatprep.subr.mxu0 0.0
    %194 = vmatpush1.msra.mxu0 0.0
    %195 = vmatprep.subr.mxu0 0.0
    %196 = vmatpush1.msra.mxu0 0.0
    %197 = vmatprep.subr.mxu0 0.0
    %198 = vmatpush1.msra.mxu0 0.0
    %199 = vmatprep.subr.mxu0 0.0
    %200 = vmatpush1.msra.mxu0 0.0
    %201 = vmatprep.subr.mxu0 0.0
    %202 = vmatpush1.msra.mxu0 0.0
    %203 = vmatprep.subr.mxu0 0.0
    %204 = vmatpush1.msra.mxu0 0.0
    %205 = vmatprep.subr.mxu0 0.0
    %206 = vmatpush1.msra.mxu0 0.0
    %207 = vmatprep.subr.mxu0 0.0
    %208 = vmatpush1.msra.mxu0 0.0
    %209 = vmatprep.subr.mxu0 0.0
    %210 = vmatpush1.msra.mxu0 0.0
    %211 = vmatprep.subr.mxu0 0.0
    %212 = vmatpush1.msra.mxu0 0.0
    %213 = vmatprep.subr.mxu0 0.0
    %214 = vmatpush1.msra.mxu0 0.0
    %215 = vmatprep.subr.mxu0 0.0
    %216 = vmatpush1.msra.mxu0 0.0
    %217 = vmatprep.subr.mxu0 0.0
    %218 = vmatpush1.msra.mxu0 0.0
    %219 = vmatprep.subr.mxu0 0.0
    %220 = vmatpush1.msra.mxu0 0.0
    %221 = vmatprep.mubr.f32.mxu0 0.0
    %222 = vmatmul.mubr.f32.gmra.mrb[0].mxu0 %v132
    %v223 = vpop.f32.mrb[0].mxu0
    %v224 = vadd.f32 %v155, %v223
    %v225 = vpop.f32.mrb[0].mxu0
    %226 = vmatprep.mubr.f32.mxu0 0.0
    %227 = vmatmul.mubr.f32.gmra.mrb[0].mxu0 %v133
    %v228 = vpop.f32.mrb[0].mxu0
    %v229 = vadd.f32 %v155, %v228
    %v230 = vpop.f32.mrb[0].mxu0
    %231 = vdwg.mxu0
    %232 = vst.msk [vmem:[#allocation2] sm:$0xff] %vm34, %v224
    %233 = vst.msk [vmem:[#allocation2 + $0x8] sm:$0xff] %vm34, %v229
    // Predicated region
    $region22: #{mlp_pallas.1} parent=1 // pred_check
      _
    $region23: #{mlp_pallas.1} parent=1 // pred_check_branch
      %235 = sbr.rel (0) target = $region25
    $region24: #{mlp_pallas.1} parent=1 // pred_region
      %s237 = ssub.s32 256, 256
      %238 = vsyncadd [#allocation3], %s237
      %s239 = sshll.u32 [#allocation2], 4
      %s240 = int_to_ptr.vmem [resolvable:$true] %s239
      %245 = dma.vmem_to_hbm [thread:$0]  %s240, 256, %s5, [#allocation3], 128, 128, 8
    $region25: #{mlp_pallas.1} parent=1 // pred_fallthru
      _
    // Predicated region
    $region26: #{mlp_pallas.1} parent=1 // pred_check
      _
    $region27: #{mlp_pallas.1} parent=1 // pred_check_branch
      %247 = sbr.rel (0) target = $region29
    $region28: #{mlp_pallas.1} parent=1 // pred_region
      %248 = dma.done [#allocation3], 256
    $region29: #{mlp_pallas.1} parent=1 // pred_fallthru
      _
    %249 = vsyncpa [#allocation3], 1

</llo_original>
